<compile_context>
chip_gen: v7x
topology: tpu7x:2x2x1
jax: 0.10.0
libtpu: 0.0.40
codegen_flags: <defaults>
</compile_context>

<pallas_src>
import functools

import jax
import jax.numpy as jnp
from jax.experimental import pallas as pl
from jax.experimental.pallas import tpu as pltpu


def _round_up(x, m):
    return ((x + m - 1) // m) * m


def _sublane_pack(itemsize):
    """Native sublane packing for the x dtype (f32: 8, bf16: 16, int8/fp8: 32)."""
    return max(8, 32 // int(itemsize))


def _choose_tiling(n_rows, d, e, x_itemsize):
    """Pick (token_tile, n_outer, n_inner).

    Preference order (largest tile within each class):
      0. tile divides n_rows exactly AND block count is even  -> no ragged tail,
         both TensorCores busy on v7x.
      1. block count even (ragged tail handled in-kernel)     -> v7x megacore.
      2. tile divides n_rows exactly (odd block count).
      3. anything (ragged tail, single outer chunk).
    The double-buffered tile working set (x + mask) is kept under ~40 MiB.
    """
    sub = _sublane_pack(x_itemsize)
    per_row = 2 * d * x_itemsize + 2 * e * 4          # x (2 bufs) + mask out (2 bufs)
    budget = 40 << 20                                 # tile working-set budget
    cap = max(sub, (budget // max(per_row, 1)) // sub * sub)
    cap = min(cap, _round_up(n_rows, sub))

    best_prio, best_tile = 99, cap
    for t in range(cap, sub - 1, -sub):
        nb = -(-n_rows // t)
        divides = (n_rows % t == 0)
        even = nb >= 2 and nb % 2 == 0
        prio = 0 if (divides and even) else (1 if even else (2 if divides else 3))
        if prio < best_prio:
            best_prio, best_tile = prio, t
            if prio == 0:
                break

    tile = best_tile
    nb = -(-n_rows // tile)
    if nb >= 2 and nb % 2 == 0:
        return tile, 2, nb // 2
    return tile, 1, nb


def _router_kernel(x_ref, wt_ref, b_ref, mask_ref, cnt_ref, prob_ref, *,
                   num_experts, total_tokens, token_tile, n_inner, ragged):
    o = pl.program_id(0)
    i = pl.program_id(1)

    # cnt/prob output blocks are resident across the inner (arbitrary) axis:
    # zero them at the first inner step of every outer chunk.
    @pl.when(i == 0)
    def _():
        cnt_ref[...] = jnp.zeros_like(cnt_ref)
        prob_ref[...] = jnp.zeros_like(prob_ref)

    # gate: logits = x @ W^T + b   (tile: (TN, D) @ (D, E) -> (TN, E), f32 acc)
    logits = jnp.dot(x_ref[...], wt_ref[...],
                     preferred_element_type=jnp.float32) + b_ref[...]

    if ragged:
        # Only the final block is partially out-of-range; its tail rows contain
        # unspecified data. Scrub them *before* exp so no NaN/Inf can leak into
        # the softmax or the accumulators.
        row0 = (o * n_inner + i) * token_tile
        rows = row0 + jax.lax.broadcasted_iota(jnp.int32, (token_tile, 1), 0)
        valid = rows < total_tokens                               # (TN, 1) bool
        logits = jnp.where(valid, logits, 0.0)

    # top-1 (first occurrence on ties, matching torch.max / F.one_hot)
    row_max = jnp.max(logits, axis=-1, keepdims=True)             # (TN, 1)
    lane = jax.lax.broadcasted_iota(jnp.int32, logits.shape, 1)   # (TN, E)
    is_max = logits == row_max
    top1_idx = jnp.min(jnp.where(is_max, lane, num_experts),
                       axis=-1, keepdims=True)                    # (TN, 1)
    mask = (lane == top1_idx).astype(jnp.float32)                 # (TN, E)
    # NOTE: the dense f32 one-hot is the module's required output, so it is
    # written directly from the kernel (index-only output would just move the
    # one-hot materialization into a separate XLA op).
    mask_ref[...] = mask

    # softmax over experts (exact reciprocal: it feeds the aux loss and the
    # divide on a (TN, 1) vector is free next to the HBM stream)
    ex = jnp.exp(logits - row_max)
    probs = ex / jnp.sum(ex, axis=-1, keepdims=True)

    mask_contrib = mask
    prob_contrib = probs
    if ragged:
        valid_f = valid.astype(jnp.float32)
        mask_contrib = mask * valid_f
        prob_contrib = probs * valid_f

    # full (8, E) partial accumulators: split the sublane axis in groups of 8
    # (free reshape) and VPU-add across groups -> no masked RMW, no XLU reduce.
    g = token_tile // 8
    cnt_ref[...] += mask_contrib.reshape(g, 8, num_experts).sum(axis=0)
    prob_ref[...] += prob_contrib.reshape(g, 8, num_experts).sum(axis=0)


def router_forward(x, gate_w, gate_b, *, token_tile=None):
    """x: (B, S, D) f32/bf16; gate_w: (E, D); gate_b: (E,). Returns (mask, loss)."""
    B, S, D = x.shape
    E = gate_w.shape[0]
    N = B * S

    x2 = x.reshape(N, D)                      # keep native dtype (bf16 stays bf16)
    # Deliberate: cast the gate weight to x's dtype so the MXU operands match
    # and the streamed x read stays in its native width (f32 test -> f32 gate).
    wt = gate_w.T.astype(x.dtype)             # (D, E)
    b2 = gate_b.reshape(1, E).astype(jnp.float32)

    itemsize = jnp.dtype(x2.dtype).itemsize
    if token_tile is None:
        token_tile, n_outer, n_inner = _choose_tiling(N, D, E, itemsize)
    else:
        sub = _sublane_pack(itemsize)
        token_tile = max(sub, _round_up(token_tile, sub))
        nb = -(-N // token_tile)
        n_outer, n_inner = (2, nb // 2) if (nb >= 2 and nb % 2 == 0) else (1, nb)

    ragged = (N % token_tile) != 0            # handled in-kernel, never padded

    # VMEM limit: working set + headroom, clamped below v7x's 64 MiB per-TC
    # (independent of what get_tpu_info reports for the whole chip).
    work = (2 * token_tile * D * itemsize      # x double buffer
            + 2 * token_tile * E * 4           # mask double buffer
            + D * E * itemsize + 2 * E * 4     # resident weights + bias
            + 4 * 8 * E * 4)                   # cnt/prob accumulator blocks
    vmem_limit = int(min(56 << 20, max(32 << 20, work + (8 << 20))))

    kernel = functools.partial(
        _router_kernel, num_experts=E, total_tokens=N,
        token_tile=token_tile, n_inner=n_inner, ragged=ragged)

    cost = pl.CostEstimate(
        flops=2 * N * D * E,
        transcendentals=N * E,
        bytes_accessed=(N * D * itemsize       # stream x
                        + N * E * 4            # write mask
                        + D * E * itemsize     # weights
                        + 2 * n_outer * 8 * E * 4))

    def row_block(o, i):
        return (o * n_inner + i, 0)

    mask_out, cnt_part, prob_part = pl.pallas_call(
        kernel,
        out_shape=(jax.ShapeDtypeStruct((N, E), jnp.float32),
                   jax.ShapeDtypeStruct((n_outer * 8, E), jnp.float32),
                   jax.ShapeDtypeStruct((n_outer * 8, E), jnp.float32)),
        grid_spec=pltpu.PrefetchScalarGridSpec(
            num_scalar_prefetch=0,
            grid=(n_outer, n_inner),
            in_specs=[
                pl.BlockSpec((token_tile, D), row_block),
                pl.BlockSpec((D, E), lambda o, i: (0, 0)),
                pl.BlockSpec((1, E), lambda o, i: (0, 0)),
            ],
            out_specs=[
                pl.BlockSpec((token_tile, E), row_block),
                pl.BlockSpec((8, E), lambda o, i: (o, 0)),
                pl.BlockSpec((8, E), lambda o, i: (o, 0)),
            ],
        ),
        compiler_params=pltpu.CompilerParams(
            dimension_semantics=("parallel", "arbitrary"),
            vmem_limit_bytes=vmem_limit),
        cost_estimate=cost,
    )(x2, wt, b2)

    # tiny epilogue: combine per-outer-chunk partials into the scalar aux loss
    cnt_tot = cnt_part.sum(axis=0)                       # (E,) token counts
    prob_tot = prob_part.sum(axis=0)                     # (E,) softmax sums
    inv_n = 1.0 / jnp.float32(N)
    loss = jnp.float32(E) * jnp.dot(cnt_tot * inv_n, prob_tot * inv_n)

    expert_mask = mask_out.reshape(B, S, E)              # free metadata reshape
    return expert_mask, loss


def _router_ref(x, gate_w, gate_b):
    """Pure-JAX reference mirroring the PyTorch forward."""
    logits = jnp.einsum("bsd,ed->bse", x, gate_w,
                        precision=jax.lax.Precision.HIGHEST) + gate_b
    E = gate_w.shape[0]
    top1 = jnp.argmax(logits, axis=-1)
    mask = jax.nn.one_hot(top1, E, dtype=jnp.float32)
    tokens_per_expert = mask.sum(axis=(0, 1))
    frac = tokens_per_expert / (x.shape[0] * x.shape[1])
    probs = jax.nn.softmax(logits, axis=-1).mean(axis=(0, 1))
    loss = E * jnp.dot(frac, probs)
    return mask, loss


if __name__ == "__main__":
    B, S, D, E = 2, 8, 32, 8
    key = jax.random.PRNGKey(0)
    kx, kw, kb = jax.random.split(key, 3)

    x = jax.random.normal(kx, (B, S, D), dtype=jnp.float32)
    # deterministic "gate" parameter init (nn.Linear(d_model, num_experts))
    gate_w = jax.random.normal(kw, (E, D), dtype=jnp.float32) * (1.0 / jnp.sqrt(D))
    gate_b = jax.random.normal(kb, (E,), dtype=jnp.float32) * 0.01

    mask, loss = router_forward(x, gate_w, gate_b)
    jax.block_until_ready((mask, loss))

    mask_ref, loss_ref = _router_ref(x, gate_w, gate_b)
    assert mask.shape == (B, S, E)
    assert jnp.allclose(mask, mask_ref), "expert mask mismatch"
    assert jnp.allclose(loss, loss_ref, atol=1e-3, rtol=1e-3), "loss mismatch"

    print("KERNEL_OK")
</pallas_src>

<mosaic_0001>
module attributes {stable_mosaic.version = 11 : i64} {
  func.func @_router_kernel(%arg0: i32, %arg1: i32, %arg2: memref<8x32xf32, #tpu.memory_space<vmem>>, %arg3: memref<32x8xf32, #tpu.memory_space<vmem>>, %arg4: memref<1x8xf32, #tpu.memory_space<vmem>>, %arg5: memref<8x8xf32, #tpu.memory_space<vmem>>, %arg6: memref<8x8xf32, #tpu.memory_space<vmem>>, %arg7: memref<8x8xf32, #tpu.memory_space<vmem>>) attributes {dimension_semantics = [#tpu.dimension_semantics<parallel>, #tpu.dimension_semantics<arbitrary>], iteration_bounds = array<i64: 2, 1>, scalar_prefetch = 0 : i64, scratch_operands = 0 : i64, tpu.core_type = #tpu.core_type<tc>, window_params = [{transform_indices = @transform_0, window_bounds = array<i64: 8, 32>}, {pipeline_mode = #tpu.pipeline_mode<synchronous>, transform_indices = @transform_1, window_bounds = array<i64: 32, 8>}, {pipeline_mode = #tpu.pipeline_mode<synchronous>, transform_indices = @transform_2, window_bounds = array<i64: 1, 8>}, {transform_indices = @transform_3, window_bounds = array<i64: 8, 8>}, {transform_indices = @transform_4, window_bounds = array<i64: 8, 8>}, {transform_indices = @transform_5, window_bounds = array<i64: 8, 8>}]} {
    %c0_i32 = arith.constant 0 : i32
    %0 = arith.cmpi eq, %arg1, %c0_i32 : i32
    %1 = arith.extui %0 : i1 to i32
    %c0_i32_0 = arith.constant 0 : i32
    %2 = arith.cmpi ne, %1, %c0_i32_0 : i32
    scf.if %2 {
      %cst_21 = arith.constant 0.000000e+00 : f32
      %40 = vector.broadcast %cst_21 : f32 to vector<8x8xf32>
      %c0_22 = arith.constant 0 : index
      %c0_23 = arith.constant 0 : index
      %41 = vector.load %arg6[%c0_22, %c0_23] : memref<8x8xf32, #tpu.memory_space<vmem>>, vector<8x8xf32>
      tpu.vector_store %arg6[%c0_22, %c0_23], %40 {strides = array<i32>} : memref<8x8xf32, #tpu.memory_space<vmem>>, vector<8x8xf32>,
      %cst_24 = arith.constant 0.000000e+00 : f32
      %42 = vector.broadcast %cst_24 : f32 to vector<8x8xf32>
      %c0_25 = arith.constant 0 : index
      %c0_26 = arith.constant 0 : index
      %43 = vector.load %arg7[%c0_25, %c0_26] : memref<8x8xf32, #tpu.memory_space<vmem>>, vector<8x8xf32>
      tpu.vector_store %arg7[%c0_25, %c0_26], %42 {strides = array<i32>} : memref<8x8xf32, #tpu.memory_space<vmem>>, vector<8x8xf32>,
    } else {
    }
    %c0 = arith.constant 0 : index
    %c0_1 = arith.constant 0 : index
    %3 = vector.load %arg2[%c0, %c0_1] : memref<8x32xf32, #tpu.memory_space<vmem>>, vector<8x32xf32>
    %c0_2 = arith.constant 0 : index
    %c0_3 = arith.constant 0 : index
    %4 = vector.load %arg3[%c0_2, %c0_3] : memref<32x8xf32, #tpu.memory_space<vmem>>, vector<32x8xf32>
    %cst = arith.constant dense<0.000000e+00> : vector<8x8xf32>
    %5 = tpu.matmul %3, %4, %cst {dimension_numbers = #tpu.dot_dimension_numbers<[1], [0], [0], [1], [0, 0, 1, 1], [], []>} : vector<8x32xf32>, vector<32x8xf32>, vector<8x8xf32> -> vector<8x8xf32>
    %c0_4 = arith.constant 0 : index
    %c0_5 = arith.constant 0 : index
    %6 = vector.load %arg4[%c0_4, %c0_5] : memref<1x8xf32, #tpu.memory_space<vmem>>, vector<1x8xf32>
    %7 = vector.broadcast %6 : vector<1x8xf32> to vector<8x8xf32>
    %8 = arith.addf %5, %7 : vector<8x8xf32>
    %cst_6 = arith.constant dense<0xFF800000> : vector<8xf32>
    %9 = vector.multi_reduction <maximumf>, %8, %cst_6 [1] : vector<8x8xf32> to vector<8xf32>
    %10 = vector.shape_cast %9 : vector<8xf32> to vector<8x1xf32>
    %11 = tpu.iota {dimensions = array<i32: 1>} : vector<8x8xi32>
    %12 = vector.broadcast %10 : vector<8x1xf32> to vector<8x8xf32>
    %13 = arith.cmpf oeq, %8, %12 : vector<8x8xf32>
    %c8_i32 = arith.constant 8 : i32
    %14 = vector.broadcast %c8_i32 : i32 to vector<8x8xi32>
    %15 = arith.select %13, %11, %14 : vector<8x8xi1>, vector<8x8xi32>
    %cst_7 = arith.constant dense<2147483647> : vector<8xi32>
    %16 = vector.multi_reduction <minsi>, %15, %cst_7 [1] : vector<8x8xi32> to vector<8xi32>
    %17 = vector.shape_cast %16 : vector<8xi32> to vector<8x1xi32>
    %18 = vector.broadcast %17 : vector<8x1xi32> to vector<8x8xi32>
    %19 = arith.cmpi eq, %11, %18 : vector<8x8xi32>
    %20 = arith.extui %19 : vector<8x8xi1> to vector<8x8xi32>
    %21 = arith.sitofp %20 : vector<8x8xi32> to vector<8x8xf32>
    %c0_8 = arith.constant 0 : index
    %c0_9 = arith.constant 0 : index
    %22 = vector.load %arg5[%c0_8, %c0_9] : memref<8x8xf32, #tpu.memory_space<vmem>>, vector<8x8xf32>
    tpu.vector_store %arg5[%c0_8, %c0_9], %21 {strides = array<i32>} : memref<8x8xf32, #tpu.memory_space<vmem>>, vector<8x8xf32>,
    %23 = vector.broadcast %10 : vector<8x1xf32> to vector<8x8xf32>
    %24 = arith.subf %8, %23 : vector<8x8xf32>
    %25 = math.exp %24 : vector<8x8xf32>
    %cst_10 = arith.constant dense<0.000000e+00> : vector<8xf32>
    %26 = vector.multi_reduction <add>, %25, %cst_10 [1] : vector<8x8xf32> to vector<8xf32>
    %27 = vector.shape_cast %26 : vector<8xf32> to vector<8x1xf32>
    %28 = vector.broadcast %27 : vector<8x1xf32> to vector<8x8xf32>
    %29 = arith.divf %25, %28 : vector<8x8xf32>
    %c0_11 = arith.constant 0 : index
    %c0_12 = arith.constant 0 : index
    %30 = vector.load %arg6[%c0_11, %c0_12] : memref<8x8xf32, #tpu.memory_space<vmem>>, vector<8x8xf32>
    %31 = vector.shape_cast %21 : vector<8x8xf32> to vector<1x8x8xf32>
    %cst_13 = arith.constant dense<0.000000e+00> : vector<8x8xf32>
    %32 = vector.multi_reduction <add>, %31, %cst_13 [0] : vector<1x8x8xf32> to vector<8x8xf32>
    %33 = arith.addf %30, %32 : vector<8x8xf32>
    %c0_14 = arith.constant 0 : index
    %c0_15 = arith.constant 0 : index
    %34 = vector.load %arg6[%c0_14, %c0_15] : memref<8x8xf32, #tpu.memory_space<vmem>>, vector<8x8xf32>
    tpu.vector_store %arg6[%c0_14, %c0_15], %33 {strides = array<i32>} : memref<8x8xf32, #tpu.memory_space<vmem>>, vector<8x8xf32>,
    %c0_16 = arith.constant 0 : index
    %c0_17 = arith.constant 0 : index
    %35 = vector.load %arg7[%c0_16, %c0_17] : memref<8x8xf32, #tpu.memory_space<vmem>>, vector<8x8xf32>
    %36 = vector.shape_cast %29 : vector<8x8xf32> to vector<1x8x8xf32>
    %cst_18 = arith.constant dense<0.000000e+00> : vector<8x8xf32>
    %37 = vector.multi_reduction <add>, %36, %cst_18 [0] : vector<1x8x8xf32> to vector<8x8xf32>
    %38 = arith.addf %35, %37 : vector<8x8xf32>
    %c0_19 = arith.constant 0 : index
    %c0_20 = arith.constant 0 : index
    %39 = vector.load %arg7[%c0_19, %c0_20] : memref<8x8xf32, #tpu.memory_space<vmem>>, vector<8x8xf32>
    tpu.vector_store %arg7[%c0_19, %c0_20], %38 {strides = array<i32>} : memref<8x8xf32, #tpu.memory_space<vmem>>, vector<8x8xf32>,
    return
  }
  func.func @transform_0(%arg0: i32, %arg1: i32) -> (i32, i32) {
    %c1_i32 = arith.constant 1 : i32
    %0 = arith.muli %arg0, %c1_i32 : i32
    %1 = arith.addi %0, %arg1 : i32
    %c0_i32 = arith.constant 0 : i32
    %c0_i32_0 = arith.constant 0 : i32
    return %1, %c0_i32 : i32, i32
  }
  func.func @transform_1(%arg0: i32, %arg1: i32) -> (i32, i32) {
    %c0_i32 = arith.constant 0 : i32
    %c0_i32_0 = arith.constant 0 : i32
    %c0_i32_1 = arith.constant 0 : i32
    return %c0_i32, %c0_i32_0 : i32, i32
  }
  func.func @transform_2(%arg0: i32, %arg1: i32) -> (i32, i32) {
    %c0_i32 = arith.constant 0 : i32
    %c0_i32_0 = arith.constant 0 : i32
    %c0_i32_1 = arith.constant 0 : i32
    return %c0_i32, %c0_i32_0 : i32, i32
  }
  func.func @transform_3(%arg0: i32, %arg1: i32) -> (i32, i32) {
    %c1_i32 = arith.constant 1 : i32
    %0 = arith.muli %arg0, %c1_i32 : i32
    %1 = arith.addi %0, %arg1 : i32
    %c0_i32 = arith.constant 0 : i32
    %c0_i32_0 = arith.constant 0 : i32
    return %1, %c0_i32 : i32, i32
  }
  func.func @transform_4(%arg0: i32, %arg1: i32) -> (i32, i32) {
    %c0_i32 = arith.constant 0 : i32
    %c0_i32_0 = arith.constant 0 : i32
    return %arg0, %c0_i32 : i32, i32
  }
  func.func @transform_5(%arg0: i32, %arg1: i32) -> (i32, i32) {
    %c0_i32 = arith.constant 0 : i32
    %c0_i32_0 = arith.constant 0 : i32
    return %arg0, %c0_i32 : i32, i32
  }
}

</mosaic_0001>

<llo_original>
// kernel: tpu_custom_call.1
$region0: #{tpu_custom_call.1}
  #allocation0 [shape = 'u32[]', space=smem, size = 0x4, offset = 0x4, fixed_abs, tag = 'smem constant byte address 0x4 - core index']
  #allocation1 [shape = 'u32[144,128]{1,0:T(1,128)}', space=vmem, size = 0x12000, scoped, tag = 'internal scratch']
  %s0 = inlined_call_operand.vmem [shape: f32[16,32], index: 0, kind: input, shape index: {}]
  %s1 = inlined_call_operand.vmem [shape: f32[32,8], index: 1, kind: input, shape index: {}]
  %s2 = inlined_call_operand.vmem [shape: f32[1,8], index: 2, kind: input, shape index: {}]
  %s3 = inlined_call_operand.vmem [shape: f32[16,8], index: 3, kind: output, shape index: {0}]
  %s4 = inlined_call_operand.vmem [shape: f32[16,8], index: 4, kind: output, shape index: {1}]
  %s5 = inlined_call_operand.vmem [shape: f32[16,8], index: 5, kind: output, shape index: {2}]
  %6 = xla_tuple %s3, %s4, %s5
  %s7 = sld [smem:[#allocation0]]
  $region65: #{tpu_custom_call.1} parent=0
    _
  %s9 = ssub.s32 1, %s7
  %s10 = scalar_select 0, %s9, %s7
  loop: start=0, step=1, limit=4
  $region2: #{tpu_custom_call.1} parent=0 // loop_pre_header
    _
  $region3: #{tpu_custom_call.1} parent=0 // loop_header
    %s12 = sphi 0, %s16
    %p13 = scmp.ge.s32.totalorder %s12, 4
    %s19 = sphi 0, %s31
    %s20 = sphi 0, %s27
    %s21 = sphi 0, %s19
    %s22 = sphi 0, %s20
    %s23 = sphi 0, %s21
    %s24 = sphi 0, %s22
    %s36 = sphi 0, %s38
    %s39 = sphi 0, %s36
    %s40 = sphi 0, %s39
    %s56 = sphi 0, %s40
    %s60 = sphi 0, %s60
    %s62 = sphi 0, %s60
    %s63 = sphi 0, %s62
    %s77 = sphi 0, %s63
    %s81 = sphi 0, %s81
    %s83 = sphi 0, %s81
    %s84 = sphi 0, %s83
    %s98 = sphi 0, %s84
    %s106 = sphi 0, %s108
    %s109 = sphi 0, %s106
    %s110 = sphi 0, %s109
    %s126 = sphi 0, %s110
    %s132 = sphi 0, %s134
    %s135 = sphi 0, %s132
    %s136 = sphi 0, %s135
    %s152 = sphi 0, %s136
    %s158 = sphi 0, %s160
    %s161 = sphi 0, %s158
    %s162 = sphi 0, %s161
    %s178 = sphi 0, %s162
  $region4: #{tpu_custom_call.1} parent=0 // loop_header_branch
    %15 = sbr.rel (%p13) target = $region8
  $region5: #{tpu_custom_call.1} parent=0 // loop_body
    %s17 = ssub.s32 %s12, 1
    %s18 = ssub.s32 %s12, 2
    %s25 = sadd.s32 1, %s20
    %p26 = scmp.ge.s32.totalorder %s25, 1
    %s27 = scalar_select %p26, 0, %s25
    %s28 = sadd.s32 1, %s19
    %s29 = scalar_select %p26, %s28, %s19
    %p30 = scmp.ge.s32.totalorder %s29, 2
    %s31 = scalar_select %p30, 0, %s29
    %s32 = sadd.s32 %s19, %s20
    %s33 = sadd.s32 %s31, %s27
    %s34 = ssub.s32 %s32, %s33
    %p35 = scmp.eq.s32.totalorder %s34, 0
    %s37 = sadd.s32 %s36, 1
    %s38 = scalar_select %p35, %s36, %s37
    %p41 = pneg %p35
    %p42 = scmp.eq.s32.totalorder %s12, 1
    %p43 = por %p41, %p42
    %p44 = scmp.ne.s32.totalorder %s36, %s39
    %p45 = scmp.eq.s32.totalorder %s12, 0
    %p46 = por %p44, %p45
    %p47 = scmp.ne.s32.totalorder %s36, %s39
    %p48 = scmp.eq.s32.totalorder %s17, 1
    %p49 = por %p47, %p48
    %p50 = scmp.ne.s32.totalorder %s39, %s40
    %p51 = scmp.eq.s32.totalorder %s17, 0
    %p52 = por %p50, %p51
    %p53 = scmp.ne.s32.totalorder %s39, %s40
    %p54 = scmp.eq.s32.totalorder %s18, 1
    %p55 = por %p53, %p54
    %p57 = scmp.ne.s32.totalorder %s40, %s56
    %p58 = scmp.eq.s32.totalorder %s18, 0
    %p59 = por %p57, %p58
    %s61 = sadd.s32 %s60, 1
    %p64 = scmp.eq.s32.totalorder %s12, 1
    %p65 = scmp.ne.s32.totalorder %s60, %s62
    %p66 = scmp.eq.s32.totalorder %s12, 0
    %p67 = por %p65, %p66
    %p68 = scmp.ne.s32.totalorder %s60, %s62
    %p69 = scmp.eq.s32.totalorder %s17, 1
    %p70 = por %p68, %p69
    %p71 = scmp.ne.s32.totalorder %s62, %s63
    %p72 = scmp.eq.s32.totalorder %s17, 0
    %p73 = por %p71, %p72
    %p74 = scmp.ne.s32.totalorder %s62, %s63
    %p75 = scmp.eq.s32.totalorder %s18, 1
    %p76 = por %p74, %p75
    %p78 = scmp.ne.s32.totalorder %s63, %s77
    %p79 = scmp.eq.s32.totalorder %s18, 0
    %p80 = por %p78, %p79
    %s82 = sadd.s32 %s81, 1
    %p85 = scmp.eq.s32.totalorder %s12, 1
    %p86 = scmp.ne.s32.totalorder %s81, %s83
    %p87 = scmp.eq.s32.totalorder %s12, 0
    %p88 = por %p86, %p87
    %p89 = scmp.ne.s32.totalorder %s81, %s83
    %p90 = scmp.eq.s32.totalorder %s17, 1
    %p91 = por %p89, %p90
    %p92 = scmp.ne.s32.totalorder %s83, %s84
    %p93 = scmp.eq.s32.totalorder %s17, 0
    %p94 = por %p92, %p93
    %p95 = scmp.ne.s32.totalorder %s83, %s84
    %p96 = scmp.eq.s32.totalorder %s18, 1
    %p97 = por %p95, %p96
    %p99 = scmp.ne.s32.totalorder %s84, %s98
    %p100 = scmp.eq.s32.totalorder %s18, 0
    %p101 = por %p99, %p100
    %s102 = sadd.s32 %s19, %s20
    %s103 = sadd.s32 %s31, %s27
    %s104 = ssub.s32 %s102, %s103
    %p105 = scmp.eq.s32.totalorder %s104, 0
    %s107 = sadd.s32 %s106, 1
    %s108 = scalar_select %p105, %s106, %s107
    %p111 = pneg %p105
    %p112 = scmp.eq.s32.totalorder %s12, 1
    %p113 = por %p111, %p112
    %p114 = scmp.ne.s32.totalorder %s106, %s109
    %p115 = scmp.eq.s32.totalorder %s12, 0
    %p116 = por %p114, %p115
    %p117 = scmp.ne.s32.totalorder %s106, %s109
    %p118 = scmp.eq.s32.totalorder %s17, 1
    %p119 = por %p117, %p118
    %p120 = scmp.ne.s32.totalorder %s109, %s110
    %p121 = scmp.eq.s32.totalorder %s17, 0
    %p122 = por %p120, %p121
    %p123 = scmp.ne.s32.totalorder %s109, %s110
    %p124 = scmp.eq.s32.totalorder %s18, 1
    %p125 = por %p123, %p124
    %p127 = scmp.ne.s32.totalorder %s110, %s126
    %p128 = scmp.eq.s32.totalorder %s18, 0
    %p129 = por %p127, %p128
    %s130 = ssub.s32 %s19, %s31
    %p131 = scmp.eq.s32.totalorder %s130, 0
    %s133 = sadd.s32 %s132, 1
    %s134 = scalar_select %p131, %s132, %s133
    %p137 = pneg %p131
    %p138 = scmp.eq.s32.totalorder %s12, 1
    %p139 = por %p137, %p138
    %p140 = scmp.ne.s32.totalorder %s132, %s135
    %p141 = scmp.eq.s32.totalorder %s12, 0
    %p142 = por %p140, %p141
    %p143 = scmp.ne.s32.totalorder %s132, %s135
    %p144 = scmp.eq.s32.totalorder %s17, 1
    %p145 = por %p143, %p144
    %p146 = scmp.ne.s32.totalorder %s135, %s136
    %p147 = scmp.eq.s32.totalorder %s17, 0
    %p148 = por %p146, %p147
    %p149 = scmp.ne.s32.totalorder %s135, %s136
    %p150 = scmp.eq.s32.totalorder %s18, 1
    %p151 = por %p149, %p150
    %p153 = scmp.ne.s32.totalorder %s136, %s152
    %p154 = scmp.eq.s32.totalorder %s18, 0
    %p155 = por %p153, %p154
    %s156 = ssub.s32 %s19, %s31
    %p157 = scmp.eq.s32.totalorder %s156, 0
    %s159 = sadd.s32 %s158, 1
    %s160 = scalar_select %p157, %s158, %s159
    %p163 = pneg %p157
    %p164 = scmp.eq.s32.totalorder %s12, 1
    %p165 = por %p163, %p164
    %p166 = scmp.ne.s32.totalorder %s158, %s161
    %p167 = scmp.eq.s32.totalorder %s12, 0
    %p168 = por %p166, %p167
    %p169 = scmp.ne.s32.totalorder %s158, %s161
    %p170 = scmp.eq.s32.totalorder %s17, 1
    %p171 = por %p169, %p170
    %p172 = scmp.ne.s32.totalorder %s161, %s162
    %p173 = scmp.eq.s32.totalorder %s17, 0
    %p174 = por %p172, %p173
    %p175 = scmp.ne.s32.totalorder %s161, %s162
    %p176 = scmp.eq.s32.totalorder %s18, 1
    %p177 = por %p175, %p176
    %p179 = scmp.ne.s32.totalorder %s162, %s178
    %p180 = scmp.eq.s32.totalorder %s18, 0
    %p181 = por %p179, %p180
    %p182 = scmp.le.s32.totalorder 1, %s12
    %p183 = scmp.lt.s32.totalorder %s12, 3
    %p184 = pnand %p182, %p183
    %p185 = pneg %p184
    // Predicated region
    $region9: #{tpu_custom_call.1} parent=5 // pred_check
      _
    $region10: #{tpu_custom_call.1} parent=5 // pred_check_branch
      %187 = sbr.rel (%p184) target = $region12
    $region11: #{tpu_custom_call.1} parent=5 // pred_region
      %s188 = ssub.s32 %s12, 1
      // Predicated region
      $region13: #{tpu_custom_call.1} parent=11 // pred_check
        %p189 = pneg %p73
      $region14: #{tpu_custom_call.1} parent=11 // pred_check_branch
        %191 = sbr.rel (%p189) target = $region16
      $region15: #{tpu_custom_call.1} parent=11 // pred_region
        _
      $region16: #{tpu_custom_call.1} parent=11 // pred_fallthru
        _
      // Predicated region
      $region17: #{tpu_custom_call.1} parent=11 // pred_check
        %p192 = pneg %p94
      $region18: #{tpu_custom_call.1} parent=11 // pred_check_branch
        %194 = sbr.rel (%p192) target = $region20
      $region19: #{tpu_custom_call.1} parent=11 // pred_region
        _
      $region20: #{tpu_custom_call.1} parent=11 // pred_fallthru
        _
    $region12: #{tpu_custom_call.1} parent=5 // pred_fallthru
      _
    %p195 = scmp.lt.s32.totalorder %s12, 2
    // Predicated region
    $region21: #{tpu_custom_call.1} parent=5 // pred_check
      %p196 = pneg %p195
    $region22: #{tpu_custom_call.1} parent=5 // pred_check_branch
      %198 = sbr.rel (%p196) target = $region24
    $region23: #{tpu_custom_call.1} parent=5 // pred_region
      // Predicated region
      $region25: #{tpu_custom_call.1} parent=23 // pred_check
        %p199 = pneg %p46
      $region26: #{tpu_custom_call.1} parent=23 // pred_check_branch
        %201 = sbr.rel (%p199) target = $region28
      $region27: #{tpu_custom_call.1} parent=23 // pred_region
        %s202 = sadd.s32 %s19, %s20
        %p203 = scmp.lt.s32.totalorder %s202, 1
        %s204 = scalar_select %p203, %s202, 1
        %s205 = smul.addr %s204, 8
        %s206 = scalar_lea.vmem %s0, %s205
        %s207 = sadd.s32 %s19, %s20
      $region28: #{tpu_custom_call.1} parent=23 // pred_fallthru
        _
    $region24: #{tpu_custom_call.1} parent=5 // pred_fallthru
      _
    %p208 = scmp.le.s32.totalorder 1, %s12
    %p209 = scmp.lt.s32.totalorder %s12, 3
    %p210 = pnand %p208, %p209
    %p211 = pneg %p210
    // Predicated region
    $region29: #{tpu_custom_call.1} parent=5 // pred_check
      _
    $region30: #{tpu_custom_call.1} parent=5 // pred_check_branch
      %213 = sbr.rel (%p210) target = $region32
    $region31: #{tpu_custom_call.1} parent=5 // pred_region
      %s214 = ssub.s32 %s12, 1
      %s215 = sadd.s32 %s21, %s22
      %p216 = scmp.lt.s32.totalorder %s215, 1
      %s217 = scalar_select %p216, %s215, 1
      %s218 = smul.addr %s217, 8
      %s219 = scalar_lea.vmem %s0, %s218
      %p220 = pneg %p52
      %p221 = pneg %p49
      %p222 = pneg %p73
      %p223 = pneg %p70
      %p224 = pneg %p94
      %p225 = pneg %p91
      %p226 = pneg %p122
      %p227 = pneg %p119
      %s228 = sadd.s32 %s21, %s22
      %p229 = scmp.lt.s32.totalorder %s228, 1
      %s230 = scalar_select %p229, %s228, 1
      %s231 = smul.addr %s230, 8
      %s232 = scalar_lea.vmem %s3, %s231
      %p233 = pneg %p148
      %p234 = pneg %p145
      %p235 = scmp.lt.s32.totalorder %s21, 1
      %s236 = scalar_select %p235, %s21, 1
      %s237 = smul.addr %s236, 8
      %s238 = scalar_lea.vmem %s4, %s237
      %p239 = pneg %p174
      %p240 = pneg %p171
      %p241 = scmp.lt.s32.totalorder %s21, 1
      %s242 = scalar_select %p241, %s21, 1
      %s243 = smul.addr %s242, 8
      %s244 = scalar_lea.vmem %s5, %s243
      %s245 = sadd.s32 %s21, %s22
      %p246 = scmp.lt.s32.totalorder %s245, 1
      %s247 = scalar_select %p246, %s245, 1
      %s248 = smul.addr %s247, 8
      %s249 = scalar_lea.vmem %s0, %s248
      %s250 = sadd.s32 %s21, %s22
      %s251 = sadd.s32 %s21, %s22
      %p252 = scmp.lt.s32.totalorder %s251, 1
      %s253 = scalar_select %p252, %s251, 1
      %s254 = smul.addr %s253, 8
      %s255 = scalar_lea.vmem %s3, %s254
      %s256 = sadd.s32 %s21, %s22
      %p257 = scmp.lt.s32.totalorder %s21, 1
      %s258 = scalar_select %p257, %s21, 1
      %s259 = smul.addr %s258, 8
      %s260 = scalar_lea.vmem %s4, %s259
      %p261 = scmp.lt.s32.totalorder %s21, 1
      %s262 = scalar_select %p261, %s21, 1
      %s263 = smul.addr %s262, 8
      %s264 = scalar_lea.vmem %s5, %s263
      %p265 = scmp.eq.s32.totalorder %s22, 0
      // Predicated region
      $region33: #{tpu_custom_call.1} parent=31 // pred_check
        %p266 = pneg %p265
      $region34: #{tpu_custom_call.1} parent=31 // pred_check_branch
        %268 = sbr.rel (%p266) target = $region36
      $region35: #{tpu_custom_call.1} parent=31 // pred_region
        %vm269 = vcmask 64512
        %270 = vst.msk [vmem:[%s260] sm:$0xff] %vm269, 0.0
        %271 = vst.msk [vmem:[%s264] sm:$0xff] %vm269, 0.0
      $region36: #{tpu_custom_call.1} parent=31 // pred_fallthru
        _
      %v272 = vld [vmem:[%s249] sm:$0xff]
      %v273 = vld [vmem:[%s1] sm:$0xff]
      %v274 = vld [vmem:[%s1 + $0x8] sm:$0xff]
      %v275 = vld [vmem:[%s1 + $0x10] sm:$0xff]
      %v276 = vld [vmem:[%s1 + $0x18] sm:$0xff]
      %v277 = vld [vmem:[%s2] sm:$0x1]
      %v279 = vlaneseq
      %v280 = vshrl.u32 %v279, 7
      %v281 = vsub.s32 0, %v280
      %v282 = vrot.slane %v277, %v281
      %vm284 = vcmask 261120
      %v286 = vsel %vm284, %v272, 0
      %288 = vmatprep.subr.mxu0 0.0
      %289 = vmatpush1.msra.mxu0 %v273
      %290 = vmatprep.subr.mxu0 0.0
      %291 = vmatpush1.msra.mxu0 %v274
      %292 = vmatprep.subr.mxu0 0.0
      %293 = vmatpush1.msra.mxu0 %v275
      %294 = vmatprep.subr.mxu0 0.0
      %295 = vmatpush1.msra.mxu0 %v276
      %296 = vmatprep.subr.mxu0 0.0
      %297 = vmatpush1.msra.mxu0 0.0
      %298 = vmatprep.subr.mxu0 0.0
      %299 = vmatpush1.msra.mxu0 0.0
      %300 = vmatprep.subr.mxu0 0.0
      %301 = vmatpush1.msra.mxu0 0.0
      %302 = vmatprep.subr.mxu0 0.0
      %303 = vmatpush1.msra.mxu0 0.0
      %304 = vmatprep.subr.mxu0 0.0
      %305 = vmatpush1.msra.mxu0 0.0
      %306 = vmatprep.subr.mxu0 0.0
      %307 = vmatpush1.msra.mxu0 0.0
      %308 = vmatprep.subr.mxu0 0.0
      %309 = vmatpush1.msra.mxu0 0.0
      %310 = vmatprep.subr.mxu0 0.0
      %311 = vmatpush1.msra.mxu0 0.0
      %312 = vmatprep.subr.mxu0 0.0
      %313 = vmatpush1.msra.mxu0 0.0
      %314 = vmatprep.subr.mxu0 0.0
      %315 = vmatpush1.msra.mxu0 0.0
      %316 = vmatprep.subr.mxu0 0.0
      %317 = vmatpush1.msra.mxu0 0.0
      %318 = vmatprep.subr.mxu0 0.0
      %319 = vmatpush1.msra.mxu0 0.0
      %320 = vmatprep.subr.mxu0 0.0
      %321 = vmatpush1.msra.mxu0 0.0
      %322 = vmatprep.subr.mxu0 0.0
      %323 = vmatpush1.msra.mxu0 0.0
      %324 = vmatprep.subr.mxu0 0.0
      %325 = vmatpush1.msra.mxu0 0.0
      %326 = vmatprep.subr.mxu0 0.0
      %327 = vmatpush1.msra.mxu0 0.0
      %328 = vmatprep.subr.mxu0 0.0
      %329 = vmatpush1.msra.mxu0 0.0
      %330 = vmatprep.subr.mxu0 0.0
      %331 = vmatpush1.msra.mxu0 0.0
      %332 = vmatprep.subr.mxu0 0.0
      %333 = vmatpush1.msra.mxu0 0.0
      %334 = vmatprep.subr.mxu0 0.0
      %335 = vmatpush1.msra.mxu0 0.0
      %336 = vmatprep.subr.mxu0 0.0
      %337 = vmatpush1.msra.mxu0 0.0
      %338 = vmatprep.subr.mxu0 0.0
      %339 = vmatpush1.msra.mxu0 0.0
      %340 = vmatprep.subr.mxu0 0.0
      %341 = vmatpush1.msra.mxu0 0.0
      %342 = vmatprep.subr.mxu0 0.0
      %343 = vmatpush1.msra.mxu0 0.0
      %344 = vmatprep.subr.mxu0 0.0
      %345 = vmatpush1.msra.mxu0 0.0
      %346 = vmatprep.subr.mxu0 0.0
      %347 = vmatpush1.msra.mxu0 0.0
      %348 = vmatprep.subr.mxu0 0.0
      %349 = vmatpush1.msra.mxu0 0.0
      %350 = vmatprep.subr.mxu0 0.0
      %351 = vmatpush1.msra.mxu0 0.0
      %352 = vmatprep.mubr.f32.mxu0 0.0
      %353 = vmatmul.mubr.f32.gmra.mrb[0].mxu0 %v286
      %v354 = vpop.f32.mrb[0].mxu0
      %v355 = vadd.f32 %v282, %v354
      %v356 = vpop.f32.mrb[0].mxu0
      %357 = vdwg.mxu0
      %vm358 = vcmask 64512
      %v359 = vsel %vm358, %v355, -inf
      %360 = vmax.xlane.f32.xlu0 %v359
      %v361 = vpop.xlane.xlu0 %360
      %v362 = vlaneseq
      %v363 = vand.u32 %v362, 127
      %vm364 = vcmp.eq.f32.partialorder %v355, %v361
      %v365 = vsel %vm364, %v363, 8
      %v366 = vsel %vm358, %v365, 2147483647
      %v367 = vand.u32 %v366, 65535
      %v368 = vshra.s32 %v366, 16
      %v369 = vcvt.s32.f32 %v367
      %v370 = vcvt.s32.f32 %v368
      %371 = vmin.xlane.f32.xlu0 %v370
      %v372 = vpop.xlane.xlu0 %371
      %vm373 = vcmp.eq.f32.partialorder %v370, %v372
      %v374 = vsel %vm373, %v369, inf
      %375 = vmin.xlane.f32.xlu0 %v374
      %v376 = vpop.xlane.xlu0 %375
      %v377 = vcvt.f32.s32 %v376
      %v378 = vcvt.f32.s32 %v372
      %v379 = vshll.u32 %v378, 16
      %v380 = vadd.s32 %v379, %v377
      %vm381 = vcmp.eq.s32.totalorder %v363, %v380
      %v382 = vsel %vm381, 1, 0
      %v383 = vcvt.s32.f32 %v382
      %384 = vst.msk [vmem:[%s255] sm:$0xff] %vm358, %v383
      %v385 = vsub.f32 %v355, %v361
      %v386 = vmul.f32 %v385, 1.442695
      %v387 = vpow.pop %v386
      %v388 = vsel %vm358, %v387, 0.0
      %389 = vadd.xlane.f32.xlu0 %v388
      %v390 = vpop.xlane.xlu0 %389
      %v391 = vrcp.pop %v390
      %v392 = vmul.f32 %v387, %v391
      %v393 = vld [vmem:[%s260] sm:$0xff]
      %v394 = vadd.f32 %v383, 0.0
      %v395 = vadd.f32 %v393, %v394
      %396 = vst.msk [vmem:[%s260] sm:$0xff] %vm358, %v395
      %v397 = vld [vmem:[%s264] sm:$0xff]
      %v398 = vadd.f32 %v392, 0.0
      %v399 = vadd.f32 %v397, %v398
      %400 = vst.msk [vmem:[%s264] sm:$0xff] %vm358, %v399
      %s401 = sadd.s32 %s21, %s22
      %p402 = scmp.lt.s32.totalorder %s401, 1
      %s403 = scalar_select %p402, %s401, 1
      %s404 = smul.addr %s403, 8
      %s405 = scalar_lea.vmem %s3, %s404
      %p406 = scmp.lt.s32.totalorder %s21, 1
      %s407 = scalar_select %p406, %s21, 1
      %s408 = smul.addr %s407, 8
      %s409 = scalar_lea.vmem %s4, %s408
      %p410 = scmp.lt.s32.totalorder %s21, 1
      %s411 = scalar_select %p410, %s21, 1
      %s412 = smul.addr %s411, 8
      %s413 = scalar_lea.vmem %s5, %s412
      // Predicated region
      $region37: #{tpu_custom_call.1} parent=31 // pred_check
        %p414 = pneg %p119
      $region38: #{tpu_custom_call.1} parent=31 // pred_check_branch
        %416 = sbr.rel (%p414) target = $region40
      $region39: #{tpu_custom_call.1} parent=31 // pred_region
        %s417 = sadd.s32 %s21, %s22
      $region40: #{tpu_custom_call.1} parent=31 // pred_fallthru
        _
      // Predicated region
      $region41: #{tpu_custom_call.1} parent=31 // pred_check
        %p418 = pneg %p145
      $region42: #{tpu_custom_call.1} parent=31 // pred_check_branch
        %420 = sbr.rel (%p418) target = $region44
      $region43: #{tpu_custom_call.1} parent=31 // pred_region
        _
      $region44: #{tpu_custom_call.1} parent=31 // pred_fallthru
        _
      // Predicated region
      $region45: #{tpu_custom_call.1} parent=31 // pred_check
        %p421 = pneg %p171
      $region46: #{tpu_custom_call.1} parent=31 // pred_check_branch
        %423 = sbr.rel (%p421) target = $region48
      $region47: #{tpu_custom_call.1} parent=31 // pred_region
        _
      $region48: #{tpu_custom_call.1} parent=31 // pred_fallthru
        _
    $region32: #{tpu_custom_call.1} parent=5 // pred_fallthru
      _
    %p424 = scmp.le.s32.totalorder 2, %s12
    // Predicated region
    $region49: #{tpu_custom_call.1} parent=5 // pred_check
      %p425 = pneg %p424
    $region50: #{tpu_custom_call.1} parent=5 // pred_check_branch
      %427 = sbr.rel (%p425) target = $region52
    $region51: #{tpu_custom_call.1} parent=5 // pred_region
      %s428 = ssub.s32 %s12, 2
      // Predicated region
      $region53: #{tpu_custom_call.1} parent=51 // pred_check
        %p429 = pneg %p125
      $region54: #{tpu_custom_call.1} parent=51 // pred_check_branch
        %431 = sbr.rel (%p429) target = $region56
      $region55: #{tpu_custom_call.1} parent=51 // pred_region
        %s432 = sadd.s32 %s23, %s24
        %p433 = scmp.lt.s32.totalorder %s432, 1
        %s434 = scalar_select %p433, %s432, 1
        %s435 = smul.addr %s434, 8
        %s436 = scalar_lea.vmem %s3, %s435
      $region56: #{tpu_custom_call.1} parent=51 // pred_fallthru
        _
      // Predicated region
      $region57: #{tpu_custom_call.1} parent=51 // pred_check
        %p437 = pneg %p151
      $region58: #{tpu_custom_call.1} parent=51 // pred_check_branch
        %439 = sbr.rel (%p437) target = $region60
      $region59: #{tpu_custom_call.1} parent=51 // pred_region
        %p440 = scmp.lt.s32.totalorder %s23, 1
        %s441 = scalar_select %p440, %s23, 1
        %s442 = smul.addr %s441, 8
        %s443 = scalar_lea.vmem %s4, %s442
      $region60: #{tpu_custom_call.1} parent=51 // pred_fallthru
        _
      // Predicated region
      $region61: #{tpu_custom_call.1} parent=51 // pred_check
        %p444 = pneg %p177
      $region62: #{tpu_custom_call.1} parent=51 // pred_check_branch
        %446 = sbr.rel (%p444) target = $region64
      $region63: #{tpu_custom_call.1} parent=51 // pred_region
        %p447 = scmp.lt.s32.totalorder %s23, 1
        %s448 = scalar_select %p447, %s23, 1
        %s449 = smul.addr %s448, 8
        %s450 = scalar_lea.vmem %s5, %s449
      $region64: #{tpu_custom_call.1} parent=51 // pred_fallthru
        _
    $region52: #{tpu_custom_call.1} parent=5 // pred_fallthru
      _
  $region6: #{tpu_custom_call.1} parent=0 // loop_footer
    %s16 = sadd.s32 1, %s12
  $region7: #{tpu_custom_call.1} parent=0 // loop_footer_branch
    %11 = sbr.rel target = $region3
  $region8: #{tpu_custom_call.1} parent=0 // loop_exit
    _

</llo_original>
